<compile_context>
chip_gen: v7x
topology: tpu7x:2x2x1
jax: 0.10.0
libtpu: 0.0.40
codegen_flags: <defaults>
</compile_context>

<pallas_src>
import functools

import jax
import jax.numpy as jnp
from jax.experimental import pallas as pl
from jax.experimental.pallas import tpu as pltpu

_H1, _H2, _H3 = 64, 24, 8
_LANES = 64          # packed-parameter lane width (== widest layer)
_ALIGN = 16          # batch tile alignment (covers f32 and bf16 sublane tiles)


def _round_up(x, m):
    return (x + m - 1) // m * m


def _pack_params(params, num_features):
    """Pack all weights/biases into one [R, 64] f32 buffer (single DMA).

    All section starts are 8-row aligned; unused rows/lanes are zero, which
    keeps the padded columns of the activations exactly zero through the net.
    """
    f = num_features
    a1 = _round_up(f, 8)          # b1 row
    a2 = a1 + 8                   # W2 (64 x 24, padded to 64 x 64)
    a3 = a2 + _H1                 # b2 row
    a4 = a3 + 8                   # W3 (24 x 8, padded to 64 x 64)
    a5 = a4 + _H1                 # b3 row
    a6 = a5 + 8                   # w4[:8] row
    a7 = a6 + 8                   # w4[8:] row
    a8 = a7 + 8                   # b4 row (broadcast over lanes)
    rows = a8 + 8

    buf = jnp.zeros((rows, _LANES), jnp.float32)
    buf = buf.at[0:f, :].set(params["w1"].T)                 # [F, 64]
    buf = buf.at[a1, :].set(params["b1"])
    buf = buf.at[a2:a2 + _H1, :_H2].set(params["w2"].T)      # [64, 24]
    buf = buf.at[a3, :_H2].set(params["b2"])
    buf = buf.at[a4:a4 + _H2, :_H3].set(params["w3"].T)      # [24, 8]
    buf = buf.at[a5, :_H3].set(params["b3"])
    w4 = params["w4"].reshape(-1)                            # [16]
    buf = buf.at[a6, :_H3].set(w4[:_H3])
    buf = buf.at[a7, :_H3].set(w4[_H3:])
    buf = buf.at[a8, :].set(params["b4"][0])
    return buf, (a1, a2, a3, a4, a5, a6, a7, a8)


def _siamese_kernel(p_ref, x1_ref, x2_ref, out_ref, *, F, offs, dot_dtype):
    a1, a2, a3, a4, a5, a6, a7, a8 = offs
    tb = x1_ref.shape[0]

    # Single matmul stream for both branches: [2*TILE_B, F].
    x = jnp.concatenate([x1_ref[...], x2_ref[...]], axis=0)

    def dense(h, w, b):
        y = jnp.dot(h.astype(dot_dtype), w.astype(dot_dtype),
                    preferred_element_type=jnp.float32)
        return jnp.maximum(y + b, 0.0)                       # bias/ReLU in f32

    h = dense(x, p_ref[0:F, :],          p_ref[a1:a1 + 1, :])   # fc1
    h = dense(h, p_ref[a2:a2 + _H1, :],  p_ref[a3:a3 + 1, :])   # fc2 (padded)
    h = dense(h, p_ref[a4:a4 + _H1, :],  p_ref[a5:a5 + 1, :])   # fc3 (padded)

    o1, o2 = h[:tb, :], h[tb:, :]                               # [TILE_B, 64]
    w4a = p_ref[a6:a6 + 1, :]                                   # [1, 64]
    w4b = p_ref[a7:a7 + 1, :]
    b4 = p_ref[a8:a8 + 1, :][:, :1]                             # [1, 1]

    # fc4 on the VPU/XLU: cat([o1, o2], 1) @ W4  ==  sum(o1*w4a + o2*w4b).
    logit = jnp.sum(o1 * w4a + o2 * w4b, axis=-1, keepdims=True) + b4
    out_ref[...] = jax.nn.sigmoid(logit).astype(out_ref.dtype)


def siamese_forward(x1, x2, params, *, tile_b=512,
                    compute_dtype=jnp.float32):
    """params: dict with fc{1..4} weights (PyTorch [out, in]) and biases."""
    B, F = x1.shape

    p_buf, offs = _pack_params(params, F)
    R = p_buf.shape[0]

    tile_b = int(min(_round_up(max(tile_b, _ALIGN), _ALIGN),
                     _round_up(B, _ALIGN)))
    Bp = _round_up(B, tile_b)
    if Bp != B:
        pad = ((0, Bp - B), (0, 0))
        x1 = jnp.pad(x1, pad)
        x2 = jnp.pad(x2, pad)
    x1 = x1.astype(compute_dtype)
    x2 = x2.astype(compute_dtype)
    n_tiles = Bp // tile_b

    kernel = functools.partial(_siamese_kernel, F=F, offs=offs,
                               dot_dtype=compute_dtype)

    flops = 4 * Bp * (F * _H1 + _H1 * _H2 + _H2 * _H3 + 2 * _H3)
    bytes_accessed = (2 * Bp * F * x1.dtype.itemsize
                      + R * _LANES * 4 + Bp * 4)

    out = pl.pallas_call(
        kernel,
        out_shape=jax.ShapeDtypeStruct((Bp, 1), jnp.float32),
        grid_spec=pltpu.PrefetchScalarGridSpec(
            num_scalar_prefetch=0,
            grid=(n_tiles,),
            in_specs=[
                pl.BlockSpec((R, _LANES), lambda i: (0, 0)),    # VMEM-resident
                pl.BlockSpec((tile_b, F), lambda i: (i, 0)),
                pl.BlockSpec((tile_b, F), lambda i: (i, 0)),
            ],
            out_specs=pl.BlockSpec((tile_b, 1), lambda i: (i, 0)),
        ),
        compiler_params=pltpu.CompilerParams(
            dimension_semantics=("parallel",)),
        cost_estimate=pl.CostEstimate(
            flops=flops, transcendentals=Bp, bytes_accessed=bytes_accessed),
    )(p_buf, x1, x2)

    return out[:B]


def _init_params(key, num_features):
    """Deterministic params mimicking torch.nn.Linear default init."""
    def linear(key, fan_in, fan_out):
        kw, kb = jax.random.split(key)
        bound = 1.0 / jnp.sqrt(float(fan_in))
        w = jax.random.uniform(kw, (fan_out, fan_in), jnp.float32, -bound, bound)
        b = jax.random.uniform(kb, (fan_out,), jnp.float32, -bound, bound)
        return w, b

    k1, k2, k3, k4 = jax.random.split(key, 4)
    w1, b1 = linear(k1, num_features, 64)
    w2, b2 = linear(k2, 64, 24)
    w3, b3 = linear(k3, 24, 8)
    w4, b4 = linear(k4, 16, 1)
    return dict(w1=w1, b1=b1, w2=w2, b2=b2, w3=w3, b3=b3, w4=w4, b4=b4)


def _reference(x1, x2, p):
    def branch(x):
        h = jnp.maximum(x @ p["w1"].T + p["b1"], 0.0)
        h = jnp.maximum(h @ p["w2"].T + p["b2"], 0.0)
        h = jnp.maximum(h @ p["w3"].T + p["b3"], 0.0)
        return h
    dist = jnp.concatenate([branch(x1), branch(x2)], axis=1)
    return jax.nn.sigmoid(dist @ p["w4"].T + p["b4"])


if __name__ == "__main__":
    num_features = 32
    batch = 8

    key = jax.random.PRNGKey(0)
    kx1, kx2, kp = jax.random.split(key, 3)
    x1 = jax.random.normal(kx1, (batch, num_features), jnp.float32)
    x2 = jax.random.normal(kx2, (batch, num_features), jnp.float32)
    params = _init_params(kp, num_features)

    ref = _reference(x1, x2, params)

    # f32 path (default).
    score = jax.block_until_ready(siamese_forward(x1, x2, params))
    assert score.shape == (batch, 1)
    assert jnp.allclose(score, ref, atol=1e-5, rtol=1e-5)

    # bf16-fed dots (v5e/v6e memory-bound relief); f32 accumulation/activations.
    score_bf16 = jax.block_until_ready(
        siamese_forward(x1, x2, params, compute_dtype=jnp.bfloat16))
    assert score_bf16.shape == (batch, 1)
    assert jnp.allclose(score_bf16, ref, atol=5e-2)

    print("KERNEL_OK")
</pallas_src>

<mosaic_0001>
module attributes {stable_mosaic.version = 11 : i64} {
  func.func @_siamese_kernel(%arg0: i32, %arg1: memref<208x64xf32, #tpu.memory_space<vmem>>, %arg2: memref<16x32xf32, #tpu.memory_space<vmem>>, %arg3: memref<16x32xf32, #tpu.memory_space<vmem>>, %arg4: memref<16x1xf32, #tpu.memory_space<vmem>>) attributes {dimension_semantics = [#tpu.dimension_semantics<parallel>], iteration_bounds = array<i64: 1>, scalar_prefetch = 0 : i64, scratch_operands = 0 : i64, tpu.core_type = #tpu.core_type<tc>, window_params = [{pipeline_mode = #tpu.pipeline_mode<synchronous>, transform_indices = @transform_0, window_bounds = array<i64: 208, 64>}, {transform_indices = @transform_1, window_bounds = array<i64: 16, 32>}, {transform_indices = @transform_2, window_bounds = array<i64: 16, 32>}, {transform_indices = @transform_3, window_bounds = array<i64: 16, 1>}]} {
    %c0 = arith.constant 0 : index
    %c0_0 = arith.constant 0 : index
    %0 = vector.load %arg2[%c0, %c0_0] : memref<16x32xf32, #tpu.memory_space<vmem>>, vector<16x32xf32>
    %c0_1 = arith.constant 0 : index
    %c0_2 = arith.constant 0 : index
    %1 = vector.load %arg3[%c0_1, %c0_2] : memref<16x32xf32, #tpu.memory_space<vmem>>, vector<16x32xf32>
    %2 = tpu.concatenate %0, %1 in 0 : vector<16x32xf32>, vector<16x32xf32> -> vector<32x32xf32>
    %c0_3 = arith.constant 0 : index
    %c0_4 = arith.constant 0 : index
    %3 = vector.load %arg1[%c0_3, %c0_4] : memref<208x64xf32, #tpu.memory_space<vmem>>, vector<32x64xf32>
    %c32 = arith.constant 32 : index
    %c0_5 = arith.constant 0 : index
    %4 = vector.load %arg1[%c32, %c0_5] : memref<208x64xf32, #tpu.memory_space<vmem>>, vector<1x64xf32>
    %cst = arith.constant dense<0.000000e+00> : vector<32x64xf32>
    %5 = tpu.matmul %2, %3, %cst {dimension_numbers = #tpu.dot_dimension_numbers<[1], [0], [0], [1], [0, 0, 1, 1], [], []>} : vector<32x32xf32>, vector<32x64xf32>, vector<32x64xf32> -> vector<32x64xf32>
    %6 = vector.broadcast %4 : vector<1x64xf32> to vector<32x64xf32>
    %7 = arith.addf %5, %6 : vector<32x64xf32>
    %cst_6 = arith.constant 0.000000e+00 : f32
    %8 = vector.broadcast %cst_6 : f32 to vector<32x64xf32>
    %9 = arith.maximumf %7, %8 : vector<32x64xf32>
    %c40 = arith.constant 40 : index
    %c0_7 = arith.constant 0 : index
    %10 = vector.load %arg1[%c40, %c0_7] : memref<208x64xf32, #tpu.memory_space<vmem>>, vector<64x64xf32>
    %c104 = arith.constant 104 : index
    %c0_8 = arith.constant 0 : index
    %11 = vector.load %arg1[%c104, %c0_8] : memref<208x64xf32, #tpu.memory_space<vmem>>, vector<1x64xf32>
    %cst_9 = arith.constant dense<0.000000e+00> : vector<32x64xf32>
    %12 = tpu.matmul %9, %10, %cst_9 {dimension_numbers = #tpu.dot_dimension_numbers<[1], [0], [0], [1], [0, 0, 1, 1], [], []>} : vector<32x64xf32>, vector<64x64xf32>, vector<32x64xf32> -> vector<32x64xf32>
    %13 = vector.broadcast %11 : vector<1x64xf32> to vector<32x64xf32>
    %14 = arith.addf %12, %13 : vector<32x64xf32>
    %cst_10 = arith.constant 0.000000e+00 : f32
    %15 = vector.broadcast %cst_10 : f32 to vector<32x64xf32>
    %16 = arith.maximumf %14, %15 : vector<32x64xf32>
    %c112 = arith.constant 112 : index
    %c0_11 = arith.constant 0 : index
    %17 = vector.load %arg1[%c112, %c0_11] : memref<208x64xf32, #tpu.memory_space<vmem>>, vector<64x64xf32>
    %c176 = arith.constant 176 : index
    %c0_12 = arith.constant 0 : index
    %18 = vector.load %arg1[%c176, %c0_12] : memref<208x64xf32, #tpu.memory_space<vmem>>, vector<1x64xf32>
    %cst_13 = arith.constant dense<0.000000e+00> : vector<32x64xf32>
    %19 = tpu.matmul %16, %17, %cst_13 {dimension_numbers = #tpu.dot_dimension_numbers<[1], [0], [0], [1], [0, 0, 1, 1], [], []>} : vector<32x64xf32>, vector<64x64xf32>, vector<32x64xf32> -> vector<32x64xf32>
    %20 = vector.broadcast %18 : vector<1x64xf32> to vector<32x64xf32>
    %21 = arith.addf %19, %20 : vector<32x64xf32>
    %cst_14 = arith.constant 0.000000e+00 : f32
    %22 = vector.broadcast %cst_14 : f32 to vector<32x64xf32>
    %23 = arith.maximumf %21, %22 : vector<32x64xf32>
    %24 = vector.extract_strided_slice %23 {offsets = [0, 0], sizes = [16, 64], strides = [1, 1]} : vector<32x64xf32> to vector<16x64xf32>
    %25 = vector.extract_strided_slice %23 {offsets = [16, 0], sizes = [16, 64], strides = [1, 1]} : vector<32x64xf32> to vector<16x64xf32>
    %c184 = arith.constant 184 : index
    %c0_15 = arith.constant 0 : index
    %26 = vector.load %arg1[%c184, %c0_15] : memref<208x64xf32, #tpu.memory_space<vmem>>, vector<1x64xf32>
    %c192 = arith.constant 192 : index
    %c0_16 = arith.constant 0 : index
    %27 = vector.load %arg1[%c192, %c0_16] : memref<208x64xf32, #tpu.memory_space<vmem>>, vector<1x64xf32>
    %c200 = arith.constant 200 : index
    %c0_17 = arith.constant 0 : index
    %28 = vector.load %arg1[%c200, %c0_17] : memref<208x64xf32, #tpu.memory_space<vmem>>, vector<1x64xf32>
    %29 = vector.extract_strided_slice %28 {offsets = [0, 0], sizes = [1, 1], strides = [1, 1]} : vector<1x64xf32> to vector<1x1xf32>
    %30 = vector.broadcast %26 : vector<1x64xf32> to vector<16x64xf32>
    %31 = arith.mulf %24, %30 : vector<16x64xf32>
    %32 = vector.broadcast %27 : vector<1x64xf32> to vector<16x64xf32>
    %33 = arith.mulf %25, %32 : vector<16x64xf32>
    %34 = arith.addf %31, %33 : vector<16x64xf32>
    %cst_18 = arith.constant dense<0.000000e+00> : vector<16xf32>
    %35 = vector.multi_reduction <add>, %34, %cst_18 [1] : vector<16x64xf32> to vector<16xf32>
    %36 = vector.shape_cast %35 : vector<16xf32> to vector<16x1xf32>
    %37 = vector.broadcast %29 : vector<1x1xf32> to vector<16x1xf32>
    %38 = arith.addf %36, %37 : vector<16x1xf32>
    %39 = arith.negf %38 : vector<16x1xf32>
    %40 = math.exp %39 : vector<16x1xf32>
    %cst_19 = arith.constant 1.000000e+00 : f32
    %41 = vector.broadcast %cst_19 : f32 to vector<16x1xf32>
    %42 = arith.addf %41, %40 : vector<16x1xf32>
    %43 = arith.divf %41, %42 : vector<16x1xf32>
    %c0_20 = arith.constant 0 : index
    %c0_21 = arith.constant 0 : index
    %44 = vector.load %arg4[%c0_20, %c0_21] : memref<16x1xf32, #tpu.memory_space<vmem>>, vector<16x1xf32>
    tpu.vector_store %arg4[%c0_20, %c0_21], %43 {strides = array<i32>} : memref<16x1xf32, #tpu.memory_space<vmem>>, vector<16x1xf32>,
    return
  }
  func.func @transform_0(%arg0: i32) -> (i32, i32) {
    %c0_i32 = arith.constant 0 : i32
    %c0_i32_0 = arith.constant 0 : i32
    %c0_i32_1 = arith.constant 0 : i32
    return %c0_i32, %c0_i32_0 : i32, i32
  }
  func.func @transform_1(%arg0: i32) -> (i32, i32) {
    %c0_i32 = arith.constant 0 : i32
    %c0_i32_0 = arith.constant 0 : i32
    return %arg0, %c0_i32 : i32, i32
  }
  func.func @transform_2(%arg0: i32) -> (i32, i32) {
    %c0_i32 = arith.constant 0 : i32
    %c0_i32_0 = arith.constant 0 : i32
    return %arg0, %c0_i32 : i32, i32
  }
  func.func @transform_3(%arg0: i32) -> (i32, i32) {
    %c0_i32 = arith.constant 0 : i32
    %c0_i32_0 = arith.constant 0 : i32
    return %arg0, %c0_i32 : i32, i32
  }
}

</mosaic_0001>

<llo_original>
// kernel: tpu_custom_call.1
$region0: #{tpu_custom_call.1}
  #allocation0 [shape = 'u32[]', space=smem, size = 0x4, offset = 0x4, fixed_abs, tag = 'smem constant byte address 0x4 - core index']
  #allocation1 [shape = 'u32[144,128]{1,0:T(1,128)}', space=vmem, size = 0x12000, scoped, tag = 'internal scratch']
  %s0 = inlined_call_operand.vmem [shape: f32[208,64], index: 0, kind: input, shape index: {}]
  %s1 = inlined_call_operand.vmem [shape: f32[16,32], index: 1, kind: input, shape index: {}]
  %s2 = inlined_call_operand.vmem [shape: f32[16,32], index: 2, kind: input, shape index: {}]
  %s3 = inlined_call_operand.vmem [shape: f32[16,1], index: 3, kind: output, shape index: {}]
  %s4 = sld [smem:[#allocation0]]
  $region22: #{tpu_custom_call.1} parent=0
    _
  %s6 = ssub.s32 1, %s4
  %s7 = scalar_select 0, %s6, %s4
  // Predicated region
  $region2: #{tpu_custom_call.1} parent=0 // pred_check
    _
  $region3: #{tpu_custom_call.1} parent=0 // pred_check_branch
    %9 = sbr.rel (0) target = $region5
  $region4: #{tpu_custom_call.1} parent=0 // pred_region
    _
  $region5: #{tpu_custom_call.1} parent=0 // pred_fallthru
    _
  // Predicated region
  $region6: #{tpu_custom_call.1} parent=0 // pred_check
    _
  $region7: #{tpu_custom_call.1} parent=0 // pred_check_branch
    %11 = sbr.rel (0) target = $region9
  $region8: #{tpu_custom_call.1} parent=0 // pred_region
    _
  $region9: #{tpu_custom_call.1} parent=0 // pred_fallthru
    _
  // Predicated region
  $region10: #{tpu_custom_call.1} parent=0 // pred_check
    _
  $region11: #{tpu_custom_call.1} parent=0 // pred_check_branch
    %13 = sbr.rel (0) target = $region13
  $region12: #{tpu_custom_call.1} parent=0 // pred_region
    _
  $region13: #{tpu_custom_call.1} parent=0 // pred_fallthru
    _
  %v14 = vld [vmem:[%s1] sm:$0xff]
  %v15 = vld [vmem:[%s1 + $0x8] sm:$0xff]
  %v16 = vld [vmem:[%s2] sm:$0xff]
  %v17 = vld [vmem:[%s2 + $0x8] sm:$0xff]
  %v18 = vld [vmem:[%s0] sm:$0xff]
  %v19 = vld [vmem:[%s0 + $0x8] sm:$0xff]
  %v20 = vld [vmem:[%s0 + $0x10] sm:$0xff]
  %v21 = vld [vmem:[%s0 + $0x18] sm:$0xff]
  %v22 = vld [vmem:[%s0 + $0x20] sm:$0x1]
  %v23 = vlaneseq
  %v24 = vshrl.u32 %v23, 7
  %v25 = vsub.s32 0, %v24
  %v26 = vrot.slane %v22, %v25
  %vm27 = vcmask 261120
  %v29 = vsel %vm27, %v14, 0
  %v32 = vsel %vm27, %v15, 0
  %v35 = vsel %vm27, %v16, 0
  %v38 = vsel %vm27, %v17, 0
  %40 = vmatprep.subr.mxu0 0.0
  %41 = vmatpush1.msra.mxu0 %v18
  %42 = vmatprep.subr.mxu0 0.0
  %43 = vmatpush1.msra.mxu0 %v19
  %44 = vmatprep.subr.mxu0 0.0
  %45 = vmatpush1.msra.mxu0 %v20
  %46 = vmatprep.subr.mxu0 0.0
  %47 = vmatpush1.msra.mxu0 %v21
  %48 = vmatprep.subr.mxu0 0.0
  %49 = vmatpush1.msra.mxu0 0.0
  %50 = vmatprep.subr.mxu0 0.0
  %51 = vmatpush1.msra.mxu0 0.0
  %52 = vmatprep.subr.mxu0 0.0
  %53 = vmatpush1.msra.mxu0 0.0
  %54 = vmatprep.subr.mxu0 0.0
  %55 = vmatpush1.msra.mxu0 0.0
  %56 = vmatprep.subr.mxu0 0.0
  %57 = vmatpush1.msra.mxu0 0.0
  %58 = vmatprep.subr.mxu0 0.0
  %59 = vmatpush1.msra.mxu0 0.0
  %60 = vmatprep.subr.mxu0 0.0
  %61 = vmatpush1.msra.mxu0 0.0
  %62 = vmatprep.subr.mxu0 0.0
  %63 = vmatpush1.msra.mxu0 0.0
  %64 = vmatprep.subr.mxu0 0.0
  %65 = vmatpush1.msra.mxu0 0.0
  %66 = vmatprep.subr.mxu0 0.0
  %67 = vmatpush1.msra.mxu0 0.0
  %68 = vmatprep.subr.mxu0 0.0
  %69 = vmatpush1.msra.mxu0 0.0
  %70 = vmatprep.subr.mxu0 0.0
  %71 = vmatpush1.msra.mxu0 0.0
  %72 = vmatprep.subr.mxu0 0.0
  %73 = vmatpush1.msra.mxu0 0.0
  %74 = vmatprep.subr.mxu0 0.0
  %75 = vmatpush1.msra.mxu0 0.0
  %76 = vmatprep.subr.mxu0 0.0
  %77 = vmatpush1.msra.mxu0 0.0
  %78 = vmatprep.subr.mxu0 0.0
  %79 = vmatpush1.msra.mxu0 0.0
  %80 = vmatprep.subr.mxu0 0.0
  %81 = vmatpush1.msra.mxu0 0.0
  %82 = vmatprep.subr.mxu0 0.0
  %83 = vmatpush1.msra.mxu0 0.0
  %84 = vmatprep.subr.mxu0 0.0
  %85 = vmatpush1.msra.mxu0 0.0
  %86 = vmatprep.subr.mxu0 0.0
  %87 = vmatpush1.msra.mxu0 0.0
  %88 = vmatprep.subr.mxu0 0.0
  %89 = vmatpush1.msra.mxu0 0.0
  %90 = vmatprep.subr.mxu0 0.0
  %91 = vmatpush1.msra.mxu0 0.0
  %92 = vmatprep.subr.mxu0 0.0
  %93 = vmatpush1.msra.mxu0 0.0
  %94 = vmatprep.subr.mxu0 0.0
  %95 = vmatpush1.msra.mxu0 0.0
  %96 = vmatprep.subr.mxu0 0.0
  %97 = vmatpush1.msra.mxu0 0.0
  %98 = vmatprep.subr.mxu0 0.0
  %99 = vmatpush1.msra.mxu0 0.0
  %100 = vmatprep.subr.mxu0 0.0
  %101 = vmatpush1.msra.mxu0 0.0
  %102 = vmatprep.subr.mxu0 0.0
  %103 = vmatpush1.msra.mxu0 0.0
  %104 = vmatprep.mubr.f32.mxu0 0.0
  %105 = vmatmul.mubr.f32.gmra.mrb[0].mxu0 %v29
  %v106 = vpop.f32.mrb[0].mxu0
  %v107 = vadd.f32 %v26, %v106
  %v108 = vpop.f32.mrb[0].mxu0
  %109 = vmatprep.mubr.f32.mxu0 0.0
  %110 = vmatmul.mubr.f32.gmra.mrb[0].mxu0 %v32
  %v111 = vpop.f32.mrb[0].mxu0
  %v112 = vadd.f32 %v26, %v111
  %v113 = vpop.f32.mrb[0].mxu0
  %114 = vmatprep.mubr.f32.mxu0 0.0
  %115 = vmatmul.mubr.f32.gmra.mrb[0].mxu0 %v35
  %v116 = vpop.f32.mrb[0].mxu0
  %v117 = vadd.f32 %v26, %v116
  %v118 = vpop.f32.mrb[0].mxu0
  %119 = vmatprep.mubr.f32.mxu0 0.0
  %120 = vmatmul.mubr.f32.gmra.mrb[0].mxu0 %v38
  %v121 = vpop.f32.mrb[0].mxu0
  %v122 = vadd.f32 %v26, %v121
  %v123 = vpop.f32.mrb[0].mxu0
  %124 = vdwg.mxu0
  %v125 = vmax.f32 %v107, 0.0
  %v126 = vmax.f32 %v112, 0.0
  %v127 = vmax.f32 %v117, 0.0
  %v128 = vmax.f32 %v122, 0.0
  %v129 = vld [vmem:[%s0 + $0x28] sm:$0xff]
  %v130 = vld [vmem:[%s0 + $0x30] sm:$0xff]
  %v131 = vld [vmem:[%s0 + $0x38] sm:$0xff]
  %v132 = vld [vmem:[%s0 + $0x40] sm:$0xff]
  %v133 = vld [vmem:[%s0 + $0x48] sm:$0xff]
  %v134 = vld [vmem:[%s0 + $0x50] sm:$0xff]
  %v135 = vld [vmem:[%s0 + $0x58] sm:$0xff]
  %v136 = vld [vmem:[%s0 + $0x60] sm:$0xff]
  %v137 = vld [vmem:[%s0 + $0x68] sm:$0x1]
  %v138 = vlaneseq
  %v139 = vshrl.u32 %v138, 7
  %v140 = vsub.s32 0, %v139
  %v141 = vrot.slane %v137, %v140
  %vm142 = vcmask 523264
  %v144 = vsel %vm142, %v125, 0
  %v147 = vsel %vm142, %v126, 0
  %v150 = vsel %vm142, %v127, 0
  %v153 = vsel %vm142, %v128, 0
  %155 = vmatprep.subr.mxu0 0.0
  %156 = vmatpush1.msra.mxu0 %v129
  %157 = vmatprep.subr.mxu0 0.0
  %158 = vmatpush1.msra.mxu0 %v130
  %159 = vmatprep.subr.mxu0 0.0
  %160 = vmatpush1.msra.mxu0 %v131
  %161 = vmatprep.subr.mxu0 0.0
  %162 = vmatpush1.msra.mxu0 %v132
  %163 = vmatprep.subr.mxu0 0.0
  %164 = vmatpush1.msra.mxu0 %v133
  %165 = vmatprep.subr.mxu0 0.0
  %166 = vmatpush1.msra.mxu0 %v134
  %167 = vmatprep.subr.mxu0 0.0
  %168 = vmatpush1.msra.mxu0 %v135
  %169 = vmatprep.subr.mxu0 0.0
  %170 = vmatpush1.msra.mxu0 %v136
  %171 = vmatprep.subr.mxu0 0.0
  %172 = vmatpush1.msra.mxu0 0.0
  %173 = vmatprep.subr.mxu0 0.0
  %174 = vmatpush1.msra.mxu0 0.0
  %175 = vmatprep.subr.mxu0 0.0
  %176 = vmatpush1.msra.mxu0 0.0
  %177 = vmatprep.subr.mxu0 0.0
  %178 = vmatpush1.msra.mxu0 0.0
  %179 = vmatprep.subr.mxu0 0.0
  %180 = vmatpush1.msra.mxu0 0.0
  %181 = vmatprep.subr.mxu0 0.0
  %182 = vmatpush1.msra.mxu0 0.0
  %183 = vmatprep.subr.mxu0 0.0
  %184 = vmatpush1.msra.mxu0 0.0
  %185 = vmatprep.subr.mxu0 0.0
  %186 = vmatpush1.msra.mxu0 0.0
  %187 = vmatprep.subr.mxu0 0.0
  %188 = vmatpush1.msra.mxu0 0.0
  %189 = vmatprep.subr.mxu0 0.0
  %190 = vmatpush1.msra.mxu0 0.0
  %191 = vmatprep.subr.mxu0 0.0
  %192 = vmatpush1.msra.mxu0 0.0
  %193 = vmatprep.subr.mxu0 0.0
  %194 = vmatpush1.msra.mxu0 0.0
  %195 = vmatprep.subr.mxu0 0.0
  %196 = vmatpush1.msra.mxu0 0.0
  %197 = vmatprep.subr.mxu0 0.0
  %198 = vmatpush1.msra.mxu0 0.0
  %199 = vmatprep.subr.mxu0 0.0
  %200 = vmatpush1.msra.mxu0 0.0
  %201 = vmatprep.subr.mxu0 0.0
  %202 = vmatpush1.msra.mxu0 0.0
  %203 = vmatprep.subr.mxu0 0.0
  %204 = vmatpush1.msra.mxu0 0.0
  %205 = vmatprep.subr.mxu0 0.0
  %206 = vmatpush1.msra.mxu0 0.0
  %207 = vmatprep.subr.mxu0 0.0
  %208 = vmatpush1.msra.mxu0 0.0
  %209 = vmatprep.subr.mxu0 0.0
  %210 = vmatpush1.msra.mxu0 0.0
  %211 = vmatprep.subr.mxu0 0.0
  %212 = vmatpush1.msra.mxu0 0.0
  %213 = vmatprep.subr.mxu0 0.0
  %214 = vmatpush1.msra.mxu0 0.0
  %215 = vmatprep.subr.mxu0 0.0
  %216 = vmatpush1.msra.mxu0 0.0
  %217 = vmatprep.subr.mxu0 0.0
  %218 = vmatpush1.msra.mxu0 0.0
  %219 = vmatprep.mubr.f32.mxu0 0.0
  %220 = vmatmul.mubr.f32.gmra.mrb[0].mxu0 %v144
  %v221 = vpop.f32.mrb[0].mxu0
  %v222 = vadd.f32 %v141, %v221
  %v223 = vpop.f32.mrb[0].mxu0
  %224 = vmatprep.mubr.f32.mxu0 0.0
  %225 = vmatmul.mubr.f32.gmra.mrb[0].mxu0 %v147
  %v226 = vpop.f32.mrb[0].mxu0
  %v227 = vadd.f32 %v141, %v226
  %v228 = vpop.f32.mrb[0].mxu0
  %229 = vmatprep.mubr.f32.mxu0 0.0
  %230 = vmatmul.mubr.f32.gmra.mrb[0].mxu0 %v150
  %v231 = vpop.f32.mrb[0].mxu0
  %v232 = vadd.f32 %v141, %v231
  %v233 = vpop.f32.mrb[0].mxu0
  %234 = vmatprep.mubr.f32.mxu0 0.0
  %235 = vmatmul.mubr.f32.gmra.mrb[0].mxu0 %v153
  %v236 = vpop.f32.mrb[0].mxu0
  %v237 = vadd.f32 %v141, %v236
  %v238 = vpop.f32.mrb[0].mxu0
  %239 = vdwg.mxu0
  %v240 = vmax.f32 %v222, 0.0
  %v241 = vmax.f32 %v227, 0.0
  %v242 = vmax.f32 %v232, 0.0
  %v243 = vmax.f32 %v237, 0.0
  %v244 = vld [vmem:[%s0 + $0x70] sm:$0xff]
  %v245 = vld [vmem:[%s0 + $0x78] sm:$0xff]
  %v246 = vld [vmem:[%s0 + $0x80] sm:$0xff]
  %v247 = vld [vmem:[%s0 + $0x88] sm:$0xff]
  %v248 = vld [vmem:[%s0 + $0x90] sm:$0xff]
  %v249 = vld [vmem:[%s0 + $0x98] sm:$0xff]
  %v250 = vld [vmem:[%s0 + $0xa0] sm:$0xff]
  %v251 = vld [vmem:[%s0 + $0xa8] sm:$0xff]
  %v252 = vld [vmem:[%s0 + $0xb0] sm:$0x1]
  %v253 = vlaneseq
  %v254 = vshrl.u32 %v253, 7
  %v255 = vsub.s32 0, %v254
  %v256 = vrot.slane %v252, %v255
  %v258 = vsel %vm142, %v240, 0
  %v261 = vsel %vm142, %v241, 0
  %v264 = vsel %vm142, %v242, 0
  %v267 = vsel %vm142, %v243, 0
  %269 = vmatprep.subr.mxu0 0.0
  %270 = vmatpush1.msra.mxu0 %v244
  %271 = vmatprep.subr.mxu0 0.0
  %272 = vmatpush1.msra.mxu0 %v245
  %273 = vmatprep.subr.mxu0 0.0
  %274 = vmatpush1.msra.mxu0 %v246
  %275 = vmatprep.subr.mxu0 0.0
  %276 = vmatpush1.msra.mxu0 %v247
  %277 = vmatprep.subr.mxu0 0.0
  %278 = vmatpush1.msra.mxu0 %v248
  %279 = vmatprep.subr.mxu0 0.0
  %280 = vmatpush1.msra.mxu0 %v249
  %281 = vmatprep.subr.mxu0 0.0
  %282 = vmatpush1.msra.mxu0 %v250
  %283 = vmatprep.subr.mxu0 0.0
  %284 = vmatpush1.msra.mxu0 %v251
  %285 = vmatprep.subr.mxu0 0.0
  %286 = vmatpush1.msra.mxu0 0.0
  %287 = vmatprep.subr.mxu0 0.0
  %288 = vmatpush1.msra.mxu0 0.0
  %289 = vmatprep.subr.mxu0 0.0
  %290 = vmatpush1.msra.mxu0 0.0
  %291 = vmatprep.subr.mxu0 0.0
  %292 = vmatpush1.msra.mxu0 0.0
  %293 = vmatprep.subr.mxu0 0.0
  %294 = vmatpush1.msra.mxu0 0.0
  %295 = vmatprep.subr.mxu0 0.0
  %296 = vmatpush1.msra.mxu0 0.0
  %297 = vmatprep.subr.mxu0 0.0
  %298 = vmatpush1.msra.mxu0 0.0
  %299 = vmatprep.subr.mxu0 0.0
  %300 = vmatpush1.msra.mxu0 0.0
  %301 = vmatprep.subr.mxu0 0.0
  %302 = vmatpush1.msra.mxu0 0.0
  %303 = vmatprep.subr.mxu0 0.0
  %304 = vmatpush1.msra.mxu0 0.0
  %305 = vmatprep.subr.mxu0 0.0
  %306 = vmatpush1.msra.mxu0 0.0
  %307 = vmatprep.subr.mxu0 0.0
  %308 = vmatpush1.msra.mxu0 0.0
  %309 = vmatprep.subr.mxu0 0.0
  %310 = vmatpush1.msra.mxu0 0.0
  %311 = vmatprep.subr.mxu0 0.0
  %312 = vmatpush1.msra.mxu0 0.0
  %313 = vmatprep.subr.mxu0 0.0
  %314 = vmatpush1.msra.mxu0 0.0
  %315 = vmatprep.subr.mxu0 0.0
  %316 = vmatpush1.msra.mxu0 0.0
  %317 = vmatprep.subr.mxu0 0.0
  %318 = vmatpush1.msra.mxu0 0.0
  %319 = vmatprep.subr.mxu0 0.0
  %320 = vmatpush1.msra.mxu0 0.0
  %321 = vmatprep.subr.mxu0 0.0
  %322 = vmatpush1.msra.mxu0 0.0
  %323 = vmatprep.subr.mxu0 0.0
  %324 = vmatpush1.msra.mxu0 0.0
  %325 = vmatprep.subr.mxu0 0.0
  %326 = vmatpush1.msra.mxu0 0.0
  %327 = vmatprep.subr.mxu0 0.0
  %328 = vmatpush1.msra.mxu0 0.0
  %329 = vmatprep.subr.mxu0 0.0
  %330 = vmatpush1.msra.mxu0 0.0
  %331 = vmatprep.subr.mxu0 0.0
  %332 = vmatpush1.msra.mxu0 0.0
  %333 = vmatprep.mubr.f32.mxu0 0.0
  %334 = vmatmul.mubr.f32.gmra.mrb[0].mxu0 %v258
  %v335 = vpop.f32.mrb[0].mxu0
  %v336 = vadd.f32 %v256, %v335
  %v337 = vpop.f32.mrb[0].mxu0
  %338 = vmatprep.mubr.f32.mxu0 0.0
  %339 = vmatmul.mubr.f32.gmra.mrb[0].mxu0 %v261
  %v340 = vpop.f32.mrb[0].mxu0
  %v341 = vadd.f32 %v256, %v340
  %v342 = vpop.f32.mrb[0].mxu0
  %343 = vmatprep.mubr.f32.mxu0 0.0
  %344 = vmatmul.mubr.f32.gmra.mrb[0].mxu0 %v264
  %v345 = vpop.f32.mrb[0].mxu0
  %v346 = vadd.f32 %v256, %v345
  %v347 = vpop.f32.mrb[0].mxu0
  %348 = vmatprep.mubr.f32.mxu0 0.0
  %349 = vmatmul.mubr.f32.gmra.mrb[0].mxu0 %v267
  %v350 = vpop.f32.mrb[0].mxu0
  %v351 = vadd.f32 %v256, %v350
  %v352 = vpop.f32.mrb[0].mxu0
  %353 = vdwg.mxu0
  %v354 = vmax.f32 %v336, 0.0
  %v355 = vmax.f32 %v341, 0.0
  %v356 = vmax.f32 %v346, 0.0
  %v357 = vmax.f32 %v351, 0.0
  %v358 = vld [vmem:[%s0 + $0xb8] sm:$0x1]
  %v359 = vld [vmem:[%s0 + $0xc0] sm:$0x1]
  %v360 = vld [vmem:[%s0 + $0xc8] sm:$0x1]
  %v361 = vlaneseq
  %v362 = vshrl.u32 %v361, 7
  %v363 = vsub.s32 0, %v362
  %v364 = vrot.slane %v358, %v363
  %v365 = vmul.f32 %v354, %v364
  %v366 = vmul.f32 %v355, %v364
  %v367 = vlaneseq
  %v368 = vshrl.u32 %v367, 7
  %v369 = vsub.s32 0, %v368
  %v370 = vrot.slane %v359, %v369
  %v371 = vmul.f32 %v356, %v370
  %v372 = vmul.f32 %v357, %v370
  %v373 = vadd.f32 %v365, %v371
  %v374 = vadd.f32 %v366, %v372
  %v375 = vsel %vm142, %v373, 0.0
  %376 = vadd.xlane.f32.xlu0 %v375
  %v377 = vpop.xlane.xlu0 %376
  %v378 = vsel %vm142, %v374, 0.0
  %379 = vadd.xlane.f32.xlu0 %v378
  %v380 = vpop.xlane.xlu0 %379
  %v381 = vlaneseq
  %v382 = vshrl.u32 %v381, 7
  %v383 = vsub.s32 0, %v382
  %v384 = vrot.slane %v360, %v383
  %v385 = vadd.f32 %v377, %v384
  %v386 = vadd.f32 %v380, %v384
  %v387 = vxor.u32 %v385, 2147483648
  %v388 = vxor.u32 %v386, 2147483648
  %v389 = vmul.f32 %v387, 1.442695
  %v390 = vpow.pop %v389
  %v391 = vmul.f32 %v388, 1.442695
  %v392 = vpow.pop %v391
  %v393 = vadd.f32 %v390, 1.0
  %v394 = vadd.f32 %v392, 1.0
  %v395 = vrcp.pop %v393
  %v396 = vmul.f32 1.0, %v395
  %v397 = vrcp.pop %v394
  %v398 = vmul.f32 1.0, %v397
  %vm399 = vcmask 7168
  %400 = vst.msk [vmem:[%s3] sm:$0xff] %vm399, %v396
  %401 = vst.msk [vmem:[%s3 + $0x8] sm:$0xff] %vm399, %v398
  // Predicated region
  $region14: #{tpu_custom_call.1} parent=0 // pred_check
    _
  $region15: #{tpu_custom_call.1} parent=0 // pred_check_branch
    %403 = sbr.rel (0) target = $region17
  $region16: #{tpu_custom_call.1} parent=0 // pred_region
    _
  $region17: #{tpu_custom_call.1} parent=0 // pred_fallthru
    _
  // Predicated region
  $region18: #{tpu_custom_call.1} parent=0 // pred_check
    _
  $region19: #{tpu_custom_call.1} parent=0 // pred_check_branch
    %405 = sbr.rel (0) target = $region21
  $region20: #{tpu_custom_call.1} parent=0 // pred_region
    _
  $region21: #{tpu_custom_call.1} parent=0 // pred_fallthru
    _

</llo_original>
